<compile_context>
chip_gen: v6e
topology: v6e:2x2x1
jax: 0.10.0
libtpu: 0.0.40
codegen_flags: <defaults>
</compile_context>

<pallas_src>
import functools

import jax
import jax.numpy as jnp
from jax.experimental import pallas as pl
from jax.experimental.pallas import tpu as pltpu


def _round_up(a, b):
    return ((a + b - 1) // b) * b


def _survmil_kernel(n_valid, x_ref, wa_ref, wf_ref, bf_ref,
                    out_ref, pooled_ref, attn_ref,
                    m_scr, l_scr, acc_scr):
    i = pl.program_id(0)
    n_steps = pl.num_programs(0)
    tile_n = x_ref.shape[0]

    @pl.when(i == 0)
    def _init():
        m_scr[...] = jnp.full_like(m_scr, -jnp.inf)
        l_scr[...] = jnp.zeros_like(l_scr)
        acc_scr[...] = jnp.zeros_like(acc_scr)

    x = x_ref[...]                                            # (TILE_N, D)

    # Lane-dense attention scores on the MXU: (1, D) x (TILE_N, D)^T -> (1, TILE_N).
    s = jax.lax.dot_general(
        wa_ref[...], x,
        dimension_numbers=(((1,), (1,)), ((), ())),
        preferred_element_type=jnp.float32)                   # (1, TILE_N), f32

    # Mask padded instances so they get exactly zero attention.
    lane = jax.lax.broadcasted_iota(jnp.int32, s.shape, 1) + i * tile_n
    s = jnp.where(lane < n_valid, s, -jnp.inf)

    # Stash raw scores (lane-dense); normalized in one shot on the last step once
    # the global max / denominator are known.
    attn_ref[pl.ds(i, 1), :] = s

    # Online softmax update + MXU pooling accumulation.
    m_prev = m_scr[...]                                       # (1, 1)
    m_new = jnp.maximum(m_prev, jnp.max(s, axis=1, keepdims=True))
    alpha = jnp.exp(m_prev - m_new)                           # (1, 1)
    p = jnp.exp(s - m_new)                                    # (1, TILE_N), f32
    l_scr[...] = alpha * l_scr[...] + jnp.sum(p, axis=1, keepdims=True)
    pooled_part = jax.lax.dot_general(
        p.astype(x.dtype), x,
        dimension_numbers=(((1,), (0,)), ((), ())),
        preferred_element_type=jnp.float32)                   # (1, D)
    acc_scr[...] = alpha * acc_scr[...] + pooled_part
    m_scr[...] = m_new

    @pl.when(i == n_steps - 1)
    def _finalize():
        # Denominator is a single positive scalar -> exact reciprocal is one op.
        inv_l = pl.reciprocal(l_scr[...], approx=False)       # (1, 1)
        pooled = acc_scr[...] * inv_l                         # (1, D), f32
        pooled_ref[...] = pooled.astype(pooled_ref.dtype)
        out_ref[...] = (
            jnp.dot(pooled, wf_ref[...], preferred_element_type=jnp.float32)
            + bf_ref[...]).astype(out_ref.dtype)              # (1, C)
        # Final attention weights: exp(s - m_final) / l_final (padded rows -> 0).
        attn_ref[...] = jnp.exp(attn_ref[...] - m_scr[...]) * inv_l


def surv_mil_forward(x_path, w_attn, b_attn, w_fc, b_fc,
                     return_feats=True, tile_n=512):
    """x_path: (N, D). w_attn: (D, 1). b_attn: scalar (unused: softmax is
    shift-invariant, so the scalar score bias cannot change any output).
    w_fc: (C, D) (PyTorch layout). b_fc: (C,)."""
    del b_attn  # exact no-op under softmax shift invariance
    N, D = x_path.shape
    C = w_fc.shape[0]

    tile_n = max(128, _round_up(int(tile_n), 128))
    tile_n = min(tile_n, _round_up(N, 128))
    n_pad = _round_up(N, tile_n)
    num_tiles = n_pad // tile_n

    x = x_path
    if n_pad != N:
        x = jnp.pad(x, ((0, n_pad - N), (0, 0)))

    wa_row = jnp.reshape(w_attn, (1, D)).astype(x.dtype)      # (1, D)
    wf_t = jnp.transpose(w_fc).astype(jnp.float32)            # (D, C)
    bf = jnp.reshape(b_fc, (1, C)).astype(jnp.float32)        # (1, C)

    itemsize = jnp.dtype(x.dtype).itemsize
    cost = pl.CostEstimate(
        flops=4 * n_pad * D + 2 * D * C,
        transcendentals=2 * n_pad + 2 * num_tiles,
        bytes_accessed=(n_pad * D * itemsize + D * itemsize + D * C * 4 + C * 4
                        + (C + D + num_tiles * tile_n) * 4),
    )

    out, pooled, attn = pl.pallas_call(
        functools.partial(_survmil_kernel, N),
        out_shape=(
            jax.ShapeDtypeStruct((1, C), jnp.float32),
            jax.ShapeDtypeStruct((1, D), jnp.float32),
            jax.ShapeDtypeStruct((num_tiles, tile_n), jnp.float32),
        ),
        grid_spec=pltpu.PrefetchScalarGridSpec(
            num_scalar_prefetch=0,
            grid=(num_tiles,),
            in_specs=[
                pl.BlockSpec((tile_n, D), lambda i: (i, 0)),   # x tiles (pipelined)
                pl.BlockSpec((1, D), lambda i: (0, 0)),        # w_attn row
                pl.BlockSpec((D, C), lambda i: (0, 0)),        # W_fc^T
                pl.BlockSpec((1, C), lambda i: (0, 0)),        # b_fc
            ],
            out_specs=(
                pl.BlockSpec((1, C), lambda i: (0, 0)),
                pl.BlockSpec((1, D), lambda i: (0, 0)),
                pl.BlockSpec((num_tiles, tile_n), lambda i: (0, 0)),
            ),
            scratch_shapes=[
                pltpu.VMEM((1, 1), jnp.float32),   # running max
                pltpu.VMEM((1, 1), jnp.float32),   # running softmax denom
                pltpu.VMEM((1, D), jnp.float32),   # unnormalized pooled accumulator
            ],
        ),
        compiler_params=pltpu.CompilerParams(
            dimension_semantics=("arbitrary",),
            vmem_limit_bytes=32 * 1024 * 1024,
        ),
        cost_estimate=cost,
    )(x, wa_row, wf_t, bf)

    attn_w = attn.reshape(-1)[:N].reshape(1, N, 1)   # torch layout (1, N, 1)
    if return_feats:
        return out, pooled, attn_w
    return out


def _reference(x_path, w_attn, b_attn, w_fc, b_fc):
    x = x_path[None, ...].astype(jnp.float32)                       # (1, N, D)
    scores = jnp.einsum('bnd,do->bno', x, w_attn.astype(jnp.float32)) + b_attn
    attn = jax.nn.softmax(scores, axis=1)
    pooled = jnp.sum(x * attn, axis=1)                              # (1, D)
    out = pooled @ w_fc.astype(jnp.float32).T + b_fc                # (1, C)
    return out, pooled, attn


if __name__ == "__main__":
    D, C = 32, 4   # path_input_dim, n_classes

    key = jax.random.PRNGKey(0)
    k_x, k_wa, k_ba, k_wf, k_bf = jax.random.split(key, 5)

    w_attn = jax.random.normal(k_wa, (D, 1), dtype=jnp.float32) * 0.1
    b_attn = jax.random.normal(k_ba, (), dtype=jnp.float32) * 0.1
    w_fc = jax.random.normal(k_wf, (C, D), dtype=jnp.float32) * 0.1
    b_fc = jax.random.normal(k_bf, (C,), dtype=jnp.float32) * 0.1

    # Two configs: single-tile (heavy padding) and multi-tile (exercises the
    # online-softmax carry + last-tile masking).
    for N, tile_n in [(8, 128), (300, 128)]:
        x_path = jax.random.normal(jax.random.fold_in(k_x, N), (N, D),
                                   dtype=jnp.float32)

        out, pooled, attn = surv_mil_forward(
            x_path, w_attn, b_attn, w_fc, b_fc, return_feats=True, tile_n=tile_n)
        jax.block_until_ready((out, pooled, attn))

        ref_out, ref_pooled, ref_attn = _reference(x_path, w_attn, b_attn, w_fc, b_fc)
        assert out.shape == (1, C) and pooled.shape == (1, D)
        assert attn.shape == (1, N, 1)
        assert jnp.allclose(out, ref_out, atol=2e-5), f"output mismatch (N={N})"
        assert jnp.allclose(pooled, ref_pooled, atol=2e-5), f"pooled mismatch (N={N})"
        assert jnp.allclose(attn, ref_attn, atol=2e-5), f"attn mismatch (N={N})"

    print("KERNEL_OK")
</pallas_src>

<mosaic_0001>
module attributes {stable_mosaic.version = 11 : i64} {
  func.func @_survmil_kernel(%arg0: i32, %arg1: memref<128x32xf32, #tpu.memory_space<vmem>>, %arg2: memref<1x32xf32, #tpu.memory_space<vmem>>, %arg3: memref<32x4xf32, #tpu.memory_space<vmem>>, %arg4: memref<1x4xf32, #tpu.memory_space<vmem>>, %arg5: memref<1x4xf32, #tpu.memory_space<vmem>>, %arg6: memref<1x32xf32, #tpu.memory_space<vmem>>, %arg7: memref<1x128xf32, #tpu.memory_space<vmem>>, %arg8: memref<1x1xf32, #tpu.memory_space<vmem>>, %arg9: memref<1x1xf32, #tpu.memory_space<vmem>>, %arg10: memref<1x32xf32, #tpu.memory_space<vmem>>) attributes {dimension_semantics = [#tpu.dimension_semantics<arbitrary>], iteration_bounds = array<i64: 1>, scalar_prefetch = 0 : i64, scratch_operands = 3 : i64, tpu.core_type = #tpu.core_type<tc>, window_params = [{transform_indices = @transform_0, window_bounds = array<i64: 128, 32>}, {pipeline_mode = #tpu.pipeline_mode<synchronous>, transform_indices = @transform_1, window_bounds = array<i64: 1, 32>}, {pipeline_mode = #tpu.pipeline_mode<synchronous>, transform_indices = @transform_2, window_bounds = array<i64: 32, 4>}, {pipeline_mode = #tpu.pipeline_mode<synchronous>, transform_indices = @transform_3, window_bounds = array<i64: 1, 4>}, {pipeline_mode = #tpu.pipeline_mode<synchronous>, transform_indices = @transform_4, window_bounds = array<i64: 1, 4>}, {pipeline_mode = #tpu.pipeline_mode<synchronous>, transform_indices = @transform_5, window_bounds = array<i64: 1, 32>}, {pipeline_mode = #tpu.pipeline_mode<synchronous>, transform_indices = @transform_6, window_bounds = array<i64: 1, 128>}]} {
    %c0_i32 = arith.constant 0 : i32
    %0 = arith.cmpi eq, %arg0, %c0_i32 : i32
    %1 = arith.extui %0 : i1 to i32
    %c0_i32_0 = arith.constant 0 : i32
    %2 = arith.cmpi ne, %1, %c0_i32_0 : i32
    scf.if %2 {
      %cst_23 = arith.constant 0xFF800000 : f32
      %41 = vector.broadcast %cst_23 : f32 to vector<1x1xf32>
      %c0_24 = arith.constant 0 : index
      %c0_25 = arith.constant 0 : index
      %42 = vector.load %arg8[%c0_24, %c0_25] : memref<1x1xf32, #tpu.memory_space<vmem>>, vector<1x1xf32>
      tpu.vector_store %arg8[%c0_24, %c0_25], %41 {strides = array<i32>} : memref<1x1xf32, #tpu.memory_space<vmem>>, vector<1x1xf32>,
      %cst_26 = arith.constant 0.000000e+00 : f32
      %43 = vector.broadcast %cst_26 : f32 to vector<1x1xf32>
      %c0_27 = arith.constant 0 : index
      %c0_28 = arith.constant 0 : index
      %44 = vector.load %arg9[%c0_27, %c0_28] : memref<1x1xf32, #tpu.memory_space<vmem>>, vector<1x1xf32>
      tpu.vector_store %arg9[%c0_27, %c0_28], %43 {strides = array<i32>} : memref<1x1xf32, #tpu.memory_space<vmem>>, vector<1x1xf32>,
      %cst_29 = arith.constant 0.000000e+00 : f32
      %45 = vector.broadcast %cst_29 : f32 to vector<1x32xf32>
      %c0_30 = arith.constant 0 : index
      %c0_31 = arith.constant 0 : index
      %46 = vector.load %arg10[%c0_30, %c0_31] : memref<1x32xf32, #tpu.memory_space<vmem>>, vector<1x32xf32>
      tpu.vector_store %arg10[%c0_30, %c0_31], %45 {strides = array<i32>} : memref<1x32xf32, #tpu.memory_space<vmem>>, vector<1x32xf32>,
    } else {
    }
    %c0 = arith.constant 0 : index
    %c0_1 = arith.constant 0 : index
    %3 = vector.load %arg1[%c0, %c0_1] : memref<128x32xf32, #tpu.memory_space<vmem>>, vector<128x32xf32>
    %c0_2 = arith.constant 0 : index
    %c0_3 = arith.constant 0 : index
    %4 = vector.load %arg2[%c0_2, %c0_3] : memref<1x32xf32, #tpu.memory_space<vmem>>, vector<1x32xf32>
    %cst = arith.constant dense<0.000000e+00> : vector<1x128xf32>
    %5 = tpu.matmul %4, %3, %cst {dimension_numbers = #tpu.dot_dimension_numbers<[1], [1], [0], [0], [0, 0, 1, 0], [], []>} : vector<1x32xf32>, vector<128x32xf32>, vector<1x128xf32> -> vector<1x128xf32>
    %6 = tpu.iota {dimensions = array<i32: 1>} : vector<1x128xi32>
    %c128_i32 = arith.constant 128 : i32
    %7 = arith.muli %arg0, %c128_i32 : i32
    %8 = vector.broadcast %7 : i32 to vector<1x128xi32>
    %9 = arith.addi %6, %8 : vector<1x128xi32>
    %c8_i32 = arith.constant 8 : i32
    %10 = vector.broadcast %c8_i32 : i32 to vector<1x128xi32>
    %11 = arith.cmpi slt, %9, %10 : vector<1x128xi32>
    %cst_4 = arith.constant 0xFF800000 : f32
    %12 = vector.broadcast %cst_4 : f32 to vector<1x128xf32>
    %13 = arith.select %11, %5, %12 : vector<1x128xi1>, vector<1x128xf32>
    %14 = arith.index_cast %arg0 : i32 to index
    %c0_5 = arith.constant 0 : index
    %15 = vector.load %arg7[%14, %c0_5] : memref<1x128xf32, #tpu.memory_space<vmem>>, vector<1x128xf32>
    tpu.vector_store %arg7[%14, %c0_5], %13 {strides = array<i32>} : memref<1x128xf32, #tpu.memory_space<vmem>>, vector<1x128xf32>,
    %c0_6 = arith.constant 0 : index
    %c0_7 = arith.constant 0 : index
    %16 = vector.load %arg8[%c0_6, %c0_7] : memref<1x1xf32, #tpu.memory_space<vmem>>, vector<1x1xf32>
    %cst_8 = arith.constant dense<0xFF800000> : vector<1xf32>
    %17 = vector.multi_reduction <maximumf>, %13, %cst_8 [1] : vector<1x128xf32> to vector<1xf32>
    %18 = vector.shape_cast %17 : vector<1xf32> to vector<1x1xf32>
    %19 = arith.maximumf %16, %18 : vector<1x1xf32>
    %20 = arith.subf %16, %19 : vector<1x1xf32>
    %21 = math.exp %20 : vector<1x1xf32>
    %22 = vector.broadcast %19 : vector<1x1xf32> to vector<1x128xf32>
    %23 = arith.subf %13, %22 : vector<1x128xf32>
    %24 = math.exp %23 : vector<1x128xf32>
    %c0_9 = arith.constant 0 : index
    %c0_10 = arith.constant 0 : index
    %25 = vector.load %arg9[%c0_9, %c0_10] : memref<1x1xf32, #tpu.memory_space<vmem>>, vector<1x1xf32>
    %26 = arith.mulf %21, %25 : vector<1x1xf32>
    %cst_11 = arith.constant dense<0.000000e+00> : vector<1xf32>
    %27 = vector.multi_reduction <add>, %24, %cst_11 [1] : vector<1x128xf32> to vector<1xf32>
    %28 = vector.shape_cast %27 : vector<1xf32> to vector<1x1xf32>
    %29 = arith.addf %26, %28 : vector<1x1xf32>
    %c0_12 = arith.constant 0 : index
    %c0_13 = arith.constant 0 : index
    %30 = vector.load %arg9[%c0_12, %c0_13] : memref<1x1xf32, #tpu.memory_space<vmem>>, vector<1x1xf32>
    tpu.vector_store %arg9[%c0_12, %c0_13], %29 {strides = array<i32>} : memref<1x1xf32, #tpu.memory_space<vmem>>, vector<1x1xf32>,
    %cst_14 = arith.constant dense<0.000000e+00> : vector<1x32xf32>
    %31 = tpu.matmul %24, %3, %cst_14 {dimension_numbers = #tpu.dot_dimension_numbers<[1], [0], [0], [1], [0, 0, 1, 1], [], []>} : vector<1x128xf32>, vector<128x32xf32>, vector<1x32xf32> -> vector<1x32xf32>
    %c0_15 = arith.constant 0 : index
    %c0_16 = arith.constant 0 : index
    %32 = vector.load %arg10[%c0_15, %c0_16] : memref<1x32xf32, #tpu.memory_space<vmem>>, vector<1x32xf32>
    %33 = vector.broadcast %21 : vector<1x1xf32> to vector<1x32xf32>
    %34 = arith.mulf %33, %32 : vector<1x32xf32>
    %35 = arith.addf %34, %31 : vector<1x32xf32>
    %c0_17 = arith.constant 0 : index
    %c0_18 = arith.constant 0 : index
    %36 = vector.load %arg10[%c0_17, %c0_18] : memref<1x32xf32, #tpu.memory_space<vmem>>, vector<1x32xf32>
    tpu.vector_store %arg10[%c0_17, %c0_18], %35 {strides = array<i32>} : memref<1x32xf32, #tpu.memory_space<vmem>>, vector<1x32xf32>,
    %c0_19 = arith.constant 0 : index
    %c0_20 = arith.constant 0 : index
    %37 = vector.load %arg8[%c0_19, %c0_20] : memref<1x1xf32, #tpu.memory_space<vmem>>, vector<1x1xf32>
    tpu.vector_store %arg8[%c0_19, %c0_20], %19 {strides = array<i32>} : memref<1x1xf32, #tpu.memory_space<vmem>>, vector<1x1xf32>,
    %c0_i32_21 = arith.constant 0 : i32
    %38 = arith.cmpi eq, %arg0, %c0_i32_21 : i32
    %39 = arith.extui %38 : i1 to i32
    %c0_i32_22 = arith.constant 0 : i32
    %40 = arith.cmpi ne, %39, %c0_i32_22 : i32
    scf.if %40 {
      %c0_23 = arith.constant 0 : index
      %c0_24 = arith.constant 0 : index
      %41 = vector.load %arg9[%c0_23, %c0_24] : memref<1x1xf32, #tpu.memory_space<vmem>>, vector<1x1xf32>
      %42 = tpu.reciprocal %41 : vector<1x1xf32> -> vector<1x1xf32>
      %c0_25 = arith.constant 0 : index
      %c0_26 = arith.constant 0 : index
      %43 = vector.load %arg10[%c0_25, %c0_26] : memref<1x32xf32, #tpu.memory_space<vmem>>, vector<1x32xf32>
      %44 = vector.broadcast %42 : vector<1x1xf32> to vector<1x32xf32>
      %45 = arith.mulf %43, %44 : vector<1x32xf32>
      %c0_27 = arith.constant 0 : index
      %c0_28 = arith.constant 0 : index
      %46 = vector.load %arg6[%c0_27, %c0_28] : memref<1x32xf32, #tpu.memory_space<vmem>>, vector<1x32xf32>
      tpu.vector_store %arg6[%c0_27, %c0_28], %45 {strides = array<i32>} : memref<1x32xf32, #tpu.memory_space<vmem>>, vector<1x32xf32>,
      %c0_29 = arith.constant 0 : index
      %c0_30 = arith.constant 0 : index
      %47 = vector.load %arg3[%c0_29, %c0_30] : memref<32x4xf32, #tpu.memory_space<vmem>>, vector<32x4xf32>
      %cst_31 = arith.constant dense<0.000000e+00> : vector<1x4xf32>
      %48 = tpu.matmul %45, %47, %cst_31 {dimension_numbers = #tpu.dot_dimension_numbers<[1], [0], [0], [1], [0, 0, 1, 1], [], []>} : vector<1x32xf32>, vector<32x4xf32>, vector<1x4xf32> -> vector<1x4xf32>
      %c0_32 = arith.constant 0 : index
      %c0_33 = arith.constant 0 : index
      %49 = vector.load %arg4[%c0_32, %c0_33] : memref<1x4xf32, #tpu.memory_space<vmem>>, vector<1x4xf32>
      %50 = arith.addf %48, %49 : vector<1x4xf32>
      %c0_34 = arith.constant 0 : index
      %c0_35 = arith.constant 0 : index
      %51 = vector.load %arg5[%c0_34, %c0_35] : memref<1x4xf32, #tpu.memory_space<vmem>>, vector<1x4xf32>
      tpu.vector_store %arg5[%c0_34, %c0_35], %50 {strides = array<i32>} : memref<1x4xf32, #tpu.memory_space<vmem>>, vector<1x4xf32>,
      %c0_36 = arith.constant 0 : index
      %c0_37 = arith.constant 0 : index
      %52 = vector.load %arg7[%c0_36, %c0_37] : memref<1x128xf32, #tpu.memory_space<vmem>>, vector<1x128xf32>
      %c0_38 = arith.constant 0 : index
      %c0_39 = arith.constant 0 : index
      %53 = vector.load %arg8[%c0_38, %c0_39] : memref<1x1xf32, #tpu.memory_space<vmem>>, vector<1x1xf32>
      %54 = vector.broadcast %53 : vector<1x1xf32> to vector<1x128xf32>
      %55 = arith.subf %52, %54 : vector<1x128xf32>
      %56 = math.exp %55 : vector<1x128xf32>
      %57 = vector.broadcast %42 : vector<1x1xf32> to vector<1x128xf32>
      %58 = arith.mulf %56, %57 : vector<1x128xf32>
      %c0_40 = arith.constant 0 : index
      %c0_41 = arith.constant 0 : index
      %59 = vector.load %arg7[%c0_40, %c0_41] : memref<1x128xf32, #tpu.memory_space<vmem>>, vector<1x128xf32>
      tpu.vector_store %arg7[%c0_40, %c0_41], %58 {strides = array<i32>} : memref<1x128xf32, #tpu.memory_space<vmem>>, vector<1x128xf32>,
    } else {
    }
    return
  }
  func.func @transform_0(%arg0: i32) -> (i32, i32) {
    %c0_i32 = arith.constant 0 : i32
    %c0_i32_0 = arith.constant 0 : i32
    return %arg0, %c0_i32 : i32, i32
  }
  func.func @transform_1(%arg0: i32) -> (i32, i32) {
    %c0_i32 = arith.constant 0 : i32
    %c0_i32_0 = arith.constant 0 : i32
    %c0_i32_1 = arith.constant 0 : i32
    return %c0_i32, %c0_i32_0 : i32, i32
  }
  func.func @transform_2(%arg0: i32) -> (i32, i32) {
    %c0_i32 = arith.constant 0 : i32
    %c0_i32_0 = arith.constant 0 : i32
    %c0_i32_1 = arith.constant 0 : i32
    return %c0_i32, %c0_i32_0 : i32, i32
  }
  func.func @transform_3(%arg0: i32) -> (i32, i32) {
    %c0_i32 = arith.constant 0 : i32
    %c0_i32_0 = arith.constant 0 : i32
    %c0_i32_1 = arith.constant 0 : i32
    return %c0_i32, %c0_i32_0 : i32, i32
  }
  func.func @transform_4(%arg0: i32) -> (i32, i32) {
    %c0_i32 = arith.constant 0 : i32
    %c0_i32_0 = arith.constant 0 : i32
    %c0_i32_1 = arith.constant 0 : i32
    return %c0_i32, %c0_i32_0 : i32, i32
  }
  func.func @transform_5(%arg0: i32) -> (i32, i32) {
    %c0_i32 = arith.constant 0 : i32
    %c0_i32_0 = arith.constant 0 : i32
    %c0_i32_1 = arith.constant 0 : i32
    return %c0_i32, %c0_i32_0 : i32, i32
  }
  func.func @transform_6(%arg0: i32) -> (i32, i32) {
    %c0_i32 = arith.constant 0 : i32
    %c0_i32_0 = arith.constant 0 : i32
    %c0_i32_1 = arith.constant 0 : i32
    return %c0_i32, %c0_i32_0 : i32, i32
  }
}

</mosaic_0001>

<llo_original>
// kernel: tpu_custom_call.1
$region0: #{tpu_custom_call.1}
  #allocation0 [shape = 'u32[]', space=smem, size = 0x4, offset = 0x4, fixed_abs, tag = 'smem constant byte address 0x4 - core index']
  #allocation1 [shape = 'u32[144,128]{1,0:T(1,128)}', space=vmem, size = 0x12000, scoped, tag = 'internal scratch']
  #allocation2 [shape = 'f32[1,1]{1,0:T(1,128)}', space=vmem, size = 0x200, scoped, tag = 'scratch operand']
  #allocation3 [shape = 'f32[1,1]{1,0:T(1,128)}', space=vmem, size = 0x200, scoped, tag = 'scratch operand']
  #allocation4 [shape = 'f32[1,32]{1,0:T(1,128)}', space=vmem, size = 0x200, scoped, tag = 'scratch operand']
  %s0 = inlined_call_operand.vmem [shape: f32[128,32], index: 0, kind: input, shape index: {}]
  %s1 = inlined_call_operand.vmem [shape: f32[1,32], index: 1, kind: input, shape index: {}]
  %s2 = inlined_call_operand.vmem [shape: f32[32,4], index: 2, kind: input, shape index: {}]
  %s3 = inlined_call_operand.vmem [shape: f32[1,4], index: 3, kind: input, shape index: {}]
  %s4 = inlined_call_operand.hbm [shape: f32[1,4], index: 4, kind: output, shape index: {0}]
  %s5 = inlined_call_operand.hbm [shape: f32[1,32], index: 5, kind: output, shape index: {1}]
  %s6 = inlined_call_operand.hbm [shape: f32[1,128], index: 6, kind: output, shape index: {2}]
  %7 = xla_tuple %s4, %s5, %s6
  %s8 = sld [smem:[#allocation0]]
  $region50: #{tpu_custom_call.1} parent=0
    _
  %s10 = ssub.s32 1, %s8
  %s11 = scalar_select 0, %s10, %s8
  $region1: #{tpu_custom_call.1} parent=0
    #allocation5 [shape = 'u8[512]{0}', space=vmem, size = 0x400, scoped, tag = 'output window, operand 0, single buffered']
    #allocation6 [shape = 's32[1]{0}', space=sflag, size = 0x4, scoped, tag = 'scoped memory for tpu_custom_call.1']
    #allocation7 [shape = 'u8[512]{0}', space=vmem, size = 0x400, scoped, tag = 'output window, operand 1, single buffered']
    #allocation8 [shape = 's32[1]{0}', space=sflag, size = 0x4, scoped, tag = 'scoped memory for tpu_custom_call.1']
    #allocation9 [shape = 'u8[512]{0}', space=vmem, size = 0x400, scoped, tag = 'output window, operand 2, single buffered']
    %12 = vsyncpa [#allocation6], 0
    %13 = vsyncpa [#allocation8], 0
    // Predicated region
    $region2: #{tpu_custom_call.1} parent=1 // pred_check
      _
    $region3: #{tpu_custom_call.1} parent=1 // pred_check_branch
      %15 = sbr.rel (0) target = $region5
    $region4: #{tpu_custom_call.1} parent=1 // pred_region
      _
    $region5: #{tpu_custom_call.1} parent=1 // pred_fallthru
      _
    // Predicated region
    $region6: #{tpu_custom_call.1} parent=1 // pred_check
      _
    $region7: #{tpu_custom_call.1} parent=1 // pred_check_branch
      %17 = sbr.rel (0) target = $region9
    $region8: #{tpu_custom_call.1} parent=1 // pred_region
      _
    $region9: #{tpu_custom_call.1} parent=1 // pred_fallthru
      _
    // Predicated region
    $region10: #{tpu_custom_call.1} parent=1 // pred_check
      _
    $region11: #{tpu_custom_call.1} parent=1 // pred_check_branch
      %19 = sbr.rel (0) target = $region13
    $region12: #{tpu_custom_call.1} parent=1 // pred_region
      _
    $region13: #{tpu_custom_call.1} parent=1 // pred_fallthru
      _
    // Predicated region
    $region14: #{tpu_custom_call.1} parent=1 // pred_check
      _
    $region15: #{tpu_custom_call.1} parent=1 // pred_check_branch
      %21 = sbr.rel (0) target = $region17
    $region16: #{tpu_custom_call.1} parent=1 // pred_region
      _
    $region17: #{tpu_custom_call.1} parent=1 // pred_fallthru
      _
    %p22 = scmp.eq.s32.totalorder 0, 0
    // Predicated region
    $region18: #{tpu_custom_call.1} parent=1 // pred_check
      %p23 = pneg %p22
    $region19: #{tpu_custom_call.1} parent=1 // pred_check_branch
      %25 = sbr.rel (%p23) target = $region21
    $region20: #{tpu_custom_call.1} parent=1 // pred_region
      %vm26 = vcmask 0
      %27 = vst.msk [vmem:[#allocation2] sm:$0x1] %vm26, -inf
      %28 = vst.msk [vmem:[#allocation3] sm:$0x1] %vm26, 0.0
      %vm29 = vcmask 253952
      %30 = vst.msk [vmem:[#allocation4] sm:$0x1] %vm29, 0.0
    $region21: #{tpu_custom_call.1} parent=1 // pred_fallthru
      _
    %v31 = vld [vmem:[%s0] sm:$0xff]
    %v32 = vld [vmem:[%s0 + $0x8] sm:$0xff]
    %v33 = vld [vmem:[%s0 + $0x10] sm:$0xff]
    %v34 = vld [vmem:[%s0 + $0x18] sm:$0xff]
    %v35 = vld [vmem:[%s0 + $0x20] sm:$0xff]
    %v36 = vld [vmem:[%s0 + $0x28] sm:$0xff]
    %v37 = vld [vmem:[%s0 + $0x30] sm:$0xff]
    %v38 = vld [vmem:[%s0 + $0x38] sm:$0xff]
    %v39 = vld [vmem:[%s0 + $0x40] sm:$0xff]
    %v40 = vld [vmem:[%s0 + $0x48] sm:$0xff]
    %v41 = vld [vmem:[%s0 + $0x50] sm:$0xff]
    %v42 = vld [vmem:[%s0 + $0x58] sm:$0xff]
    %v43 = vld [vmem:[%s0 + $0x60] sm:$0xff]
    %v44 = vld [vmem:[%s0 + $0x68] sm:$0xff]
    %v45 = vld [vmem:[%s0 + $0x70] sm:$0xff]
    %v46 = vld [vmem:[%s0 + $0x78] sm:$0xff]
    %v47 = vld [vmem:[%s1] sm:$0x1]
    %vm48 = vcmask 261120
    %v50 = vsel %vm48, %v47, 0
    %v53 = vsel %vm48, %v31, 0
    %v56 = vsel %vm48, %v32, 0
    %v59 = vsel %vm48, %v33, 0
    %v62 = vsel %vm48, %v34, 0
    %v65 = vsel %vm48, %v35, 0
    %v68 = vsel %vm48, %v36, 0
    %v71 = vsel %vm48, %v37, 0
    %v74 = vsel %vm48, %v38, 0
    %v77 = vsel %vm48, %v39, 0
    %v80 = vsel %vm48, %v40, 0
    %v83 = vsel %vm48, %v41, 0
    %v86 = vsel %vm48, %v42, 0
    %v89 = vsel %vm48, %v43, 0
    %v92 = vsel %vm48, %v44, 0
    %v95 = vsel %vm48, %v45, 0
    %v98 = vsel %vm48, %v46, 0
    %100 = vmatprep.subr.mxu0 0.0
    %101 = vmatpush1.xpose.msra.mxu0 %v98
    %102 = vmatprep.subr.mxu0 0.0
    %103 = vmatpush1.xpose.msra.mxu0 %v95
    %104 = vmatprep.subr.mxu0 0.0
    %105 = vmatpush1.xpose.msra.mxu0 %v92
    %106 = vmatprep.subr.mxu0 0.0
    %107 = vmatpush1.xpose.msra.mxu0 %v89
    %108 = vmatprep.subr.mxu0 0.0
    %109 = vmatpush1.xpose.msra.mxu0 %v86
    %110 = vmatprep.subr.mxu0 0.0
    %111 = vmatpush1.xpose.msra.mxu0 %v83
    %112 = vmatprep.subr.mxu0 0.0
    %113 = vmatpush1.xpose.msra.mxu0 %v80
    %114 = vmatprep.subr.mxu0 0.0
    %115 = vmatpush1.xpose.msra.mxu0 %v77
    %116 = vmatprep.subr.mxu0 0.0
    %117 = vmatpush1.xpose.msra.mxu0 %v74
    %118 = vmatprep.subr.mxu0 0.0
    %119 = vmatpush1.xpose.msra.mxu0 %v71
    %120 = vmatprep.subr.mxu0 0.0
    %121 = vmatpush1.xpose.msra.mxu0 %v68
    %122 = vmatprep.subr.mxu0 0.0
    %123 = vmatpush1.xpose.msra.mxu0 %v65
    %124 = vmatprep.subr.mxu0 0.0
    %125 = vmatpush1.xpose.msra.mxu0 %v62
    %126 = vmatprep.subr.mxu0 0.0
    %127 = vmatpush1.xpose.msra.mxu0 %v59
    %128 = vmatprep.subr.mxu0 0.0
    %129 = vmatpush1.xpose.msra.mxu0 %v56
    %130 = vmatprep.subr.mxu0 0.0
    %131 = vmatpush1.xpose.msra.mxu0 %v53
    %132 = vmatprep.subr.mxu0 0.0
    %133 = vmatpush2.xpose.msra.mxu0 0.0
    %134 = vmatprep.subr.mxu0 0.0
    %135 = vmatpush2.xpose.msra.mxu0 0.0
    %136 = vmatprep.subr.mxu0 0.0
    %137 = vmatpush2.xpose.msra.mxu0 0.0
    %138 = vmatprep.subr.mxu0 0.0
    %139 = vmatpush2.xpose.msra.mxu0 0.0
    %140 = vmatprep.subr.mxu0 0.0
    %141 = vmatpush2.xpose.msra.mxu0 0.0
    %142 = vmatprep.subr.mxu0 0.0
    %143 = vmatpush2.xpose.msra.mxu0 0.0
    %144 = vmatprep.subr.mxu0 0.0
    %145 = vmatpush2.xpose.msra.mxu0 0.0
    %146 = vmatprep.subr.mxu0 0.0
    %147 = vmatpush2.xpose.msra.mxu0 0.0
    %148 = vmatprep.subr.mxu0 0.0
    %149 = vmatpush2.xpose.msra.mxu0 0.0
    %150 = vmatprep.subr.mxu0 0.0
    %151 = vmatpush2.xpose.msra.mxu0 0.0
    %152 = vmatprep.subr.mxu0 0.0
    %153 = vmatpush2.xpose.msra.mxu0 0.0
    %154 = vmatprep.subr.mxu0 0.0
    %155 = vmatpush2.xpose.msra.mxu0 0.0
    %156 = vmatprep.subr.mxu0 0.0
    %157 = vmatpush2.xpose.msra.mxu0 0.0
    %158 = vmatprep.subr.mxu0 0.0
    %159 = vmatpush2.xpose.msra.mxu0 0.0
    %160 = vmatprep.subr.mxu0 0.0
    %161 = vmatpush2.xpose.msra.mxu0 0.0
    %162 = vmatprep.subr.mxu0 0.0
    %163 = vmatpush2.xpose.msra.mxu0 0.0
    %164 = vmatprep.mubr.f32.mxu0 0.0
    %165 = vmatmul.mubr.f32.gmra.mxu0 %v50
    %v166 = vpop.f32.mrf.mxu0
    %v167 = vadd.f32 0.0, %v166
    %v168 = vpop.f32.mrf.mxu0
    %169 = vdwg.mxu0
    %v170 = vlaneseq
    %v171 = vand.u32 %v170, 127
    %s172 = smul.u32 0, 128
    %v173 = vstv %s172
    %v174 = vadd.s32 %v171, %v173
    %vm175 = vcmp.lt.s32.totalorder %v174, 8
    %v176 = vsel %vm175, %v167, -inf
    %177 = vst [vmem:[#allocation9] sm:$0x1] %v176
    %v178 = vld [vmem:[#allocation2] sm:$0x1]
    %vm179 = vcmask 1040384
    %v180 = vsel %vm179, %v176, -inf
    %181 = vmax.xlane.f32.xlu0 %v180
    %v182 = vpop.xlane.xlu0 %181
    %v183 = vmax.f32 %v178, %v182
    %v184 = vsub.f32 %v178, %v183
    %v185 = vmul.f32 %v184, 1.442695
    %v186 = vpow.pop %v185
    %188 = vset.pattern.permute.xlu0 0
    %189 = vperm.xlu0 %188, %v183
    %v190 = vpop.permute.xlu0 %189
    %v192 = vlaneseq
    %v193 = vshrl.u32 %v192, 7
    %v194 = vsub.s32 0, %v193
    %v195 = vrot.slane %v190, %v194
    %v196 = vsub.f32 %v176, %v195
    %v197 = vmul.f32 %v196, 1.442695
    %v198 = vpow.pop %v197
    %v199 = vld [vmem:[#allocation3] sm:$0x1]
    %v200 = vmul.f32 %v186, %v199
    %v201 = vsel %vm179, %v198, 0.0
    %202 = vadd.xlane.f32.xlu0 %v201
    %v203 = vpop.xlane.xlu0 %202
    %v204 = vadd.f32 %v200, %v203
    %vm205 = vcmask 0
    %206 = vst.msk [vmem:[#allocation3] sm:$0x1] %vm205, %v204
    %207 = vmatprep.subr.mxu0 0.0
    %208 = vmatpush1.msra.mxu0 %v46
    %209 = vmatprep.subr.mxu0 0.0
    %210 = vmatpush1.msra.mxu0 %v45
    %211 = vmatprep.subr.mxu0 0.0
    %212 = vmatpush1.msra.mxu0 %v44
    %213 = vmatprep.subr.mxu0 0.0
    %214 = vmatpush1.msra.mxu0 %v43
    %215 = vmatprep.subr.mxu0 0.0
    %216 = vmatpush1.msra.mxu0 %v42
    %217 = vmatprep.subr.mxu0 0.0
    %218 = vmatpush1.msra.mxu0 %v41
    %219 = vmatprep.subr.mxu0 0.0
    %220 = vmatpush1.msra.mxu0 %v40
    %221 = vmatprep.subr.mxu0 0.0
    %222 = vmatpush1.msra.mxu0 %v39
    %223 = vmatprep.subr.mxu0 0.0
    %224 = vmatpush1.msra.mxu0 %v38
    %225 = vmatprep.subr.mxu0 0.0
    %226 = vmatpush1.msra.mxu0 %v37
    %227 = vmatprep.subr.mxu0 0.0
    %228 = vmatpush1.msra.mxu0 %v36
    %229 = vmatprep.subr.mxu0 0.0
    %230 = vmatpush1.msra.mxu0 %v35
    %231 = vmatprep.subr.mxu0 0.0
    %232 = vmatpush1.msra.mxu0 %v34
    %233 = vmatprep.subr.mxu0 0.0
    %234 = vmatpush1.msra.mxu0 %v33
    %235 = vmatprep.subr.mxu0 0.0
    %236 = vmatpush1.msra.mxu0 %v32
    %237 = vmatprep.subr.mxu0 0.0
    %238 = vmatpush1.msra.mxu0 %v31
    %239 = vmatprep.subr.mxu0 0.0
    %240 = vmatpush2.msra.mxu0 0.0
    %241 = vmatprep.subr.mxu0 0.0
    %242 = vmatpush2.msra.mxu0 0.0
    %243 = vmatprep.subr.mxu0 0.0
    %244 = vmatpush2.msra.mxu0 0.0
    %245 = vmatprep.subr.mxu0 0.0
    %246 = vmatpush2.msra.mxu0 0.0
    %247 = vmatprep.subr.mxu0 0.0
    %248 = vmatpush2.msra.mxu0 0.0
    %249 = vmatprep.subr.mxu0 0.0
    %250 = vmatpush2.msra.mxu0 0.0
    %251 = vmatprep.subr.mxu0 0.0
    %252 = vmatpush2.msra.mxu0 0.0
    %253 = vmatprep.subr.mxu0 0.0
    %254 = vmatpush2.msra.mxu0 0.0
    %255 = vmatprep.subr.mxu0 0.0
    %256 = vmatpush2.msra.mxu0 0.0
    %257 = vmatprep.subr.mxu0 0.0
    %258 = vmatpush2.msra.mxu0 0.0
    %259 = vmatprep.subr.mxu0 0.0
    %260 = vmatpush2.msra.mxu0 0.0
    %261 = vmatprep.subr.mxu0 0.0
    %262 = vmatpush2.msra.mxu0 0.0
    %263 = vmatprep.subr.mxu0 0.0
    %264 = vmatpush2.msra.mxu0 0.0
    %265 = vmatprep.subr.mxu0 0.0
    %266 = vmatpush2.msra.mxu0 0.0
    %267 = vmatprep.subr.mxu0 0.0
    %268 = vmatpush2.msra.mxu0 0.0
    %269 = vmatprep.subr.mxu0 0.0
    %270 = vmatpush2.msra.mxu0 0.0
    %271 = vmatprep.mubr.f32.mxu0 0.0
    %272 = vmatmul.mubr.f32.gmra.mxu0 %v198
    %v273 = vpop.f32.mrf.mxu0
    %v274 = vadd.f32 0.0, %v273
    %v275 = vpop.f32.mrf.mxu0
    %276 = vdwg.mxu0
    %v277 = vld [vmem:[#allocation4] sm:$0x1]
    %279 = vset.pattern.permute.xlu0 0
    %280 = vperm.xlu0 %279, %v186
    %v281 = vpop.permute.xlu0 %280
    %v283 = vlaneseq
    %v284 = vshrl.u32 %v283, 7
    %v285 = vsub.s32 0, %v284
    %v286 = vrot.slane %v281, %v285
    %v287 = vmul.f32 %v286, %v277
    %v288 = vadd.f32 %v287, %v274
    %vm289 = vcmask 253952
    %290 = vst.msk [vmem:[#allocation4] sm:$0x1] %vm289, %v288
    %291 = vst.msk [vmem:[#allocation2] sm:$0x1] %vm205, %v183
    // Predicated region
    $region22: #{tpu_custom_call.1} parent=1 // pred_check
      %p292 = pneg %p22
    $region23: #{tpu_custom_call.1} parent=1 // pred_check_branch
      %294 = sbr.rel (%p292) target = $region25
    $region24: #{tpu_custom_call.1} parent=1 // pred_region
      %v295 = vld [vmem:[#allocation3] sm:$0x1]
      %v296 = vrcp.pop %v295
      %v297 = vld [vmem:[#allocation4] sm:$0x1]
      %299 = vset.pattern.permute.xlu0 0
      %300 = vperm.xlu0 %299, %v296
      %v301 = vpop.permute.xlu0 %300
      %v303 = vlaneseq
      %v304 = vshrl.u32 %v303, 7
      %v305 = vsub.s32 0, %v304
      %v306 = vrot.slane %v301, %v305
      %v307 = vmul.f32 %v297, %v306
      %308 = vst.msk [vmem:[#allocation7] sm:$0x1] %vm289, %v307
      %v309 = vld [vmem:[%s2] sm:$0xff]
      %v310 = vld [vmem:[%s2 + $0x8] sm:$0xff]
      %v311 = vld [vmem:[%s2 + $0x10] sm:$0xff]
      %v312 = vld [vmem:[%s2 + $0x18] sm:$0xff]
      %v313 = vld [vmem:[%s3] sm:$0x1]
      %v315 = vsel %vm48, %v307, 0
      %317 = vmatprep.subr.mxu0 0.0
      %318 = vmatpush1.msra.mxu0 0.0
      %319 = vmatprep.subr.mxu0 0.0
      %320 = vmatpush1.msra.mxu0 0.0
      %321 = vmatprep.subr.mxu0 0.0
      %322 = vmatpush1.msra.mxu0 0.0
      %323 = vmatprep.subr.mxu0 0.0
      %324 = vmatpush1.msra.mxu0 0.0
      %325 = vmatprep.subr.mxu0 0.0
      %326 = vmatpush1.msra.mxu0 0.0
      %327 = vmatprep.subr.mxu0 0.0
      %328 = vmatpush1.msra.mxu0 0.0
      %329 = vmatprep.subr.mxu0 0.0
      %330 = vmatpush1.msra.mxu0 0.0
      %331 = vmatprep.subr.mxu0 0.0
      %332 = vmatpush1.msra.mxu0 0.0
      %333 = vmatprep.subr.mxu0 0.0
      %334 = vmatpush1.msra.mxu0 0.0
      %335 = vmatprep.subr.mxu0 0.0
      %336 = vmatpush1.msra.mxu0 0.0
      %337 = vmatprep.subr.mxu0 0.0
      %338 = vmatpush1.msra.mxu0 0.0
      %339 = vmatprep.subr.mxu0 0.0
      %340 = vmatpush1.msra.mxu0 0.0
      %341 = vmatprep.subr.mxu0 0.0
      %342 = vmatpush1.msra.mxu0 %v312
      %343 = vmatprep.subr.mxu0 0.0
      %344 = vmatpush1.msra.mxu0 %v311
      %345 = vmatprep.subr.mxu0 0.0
      %346 = vmatpush1.msra.mxu0 %v310
      %347 = vmatprep.subr.mxu0 0.0
      %348 = vmatpush1.msra.mxu0 %v309
      %349 = vmatprep.subr.mxu0 0.0
      %350 = vmatpush2.msra.mxu0 0.0
      %351 = vmatprep.subr.mxu0 0.0
      %352 = vmatpush2.msra.mxu0 0.0
      %353 = vmatprep.subr.mxu0 0.0
      %354 = vmatpush2.msra.mxu0 0.0
      %355 = vmatprep.subr.mxu0 0.0
      %356 = vmatpush2.msra.mxu0 0.0
      %357 = vmatprep.subr.mxu0 0.0
      %358 = vmatpush2.msra.mxu0 0.0
      %359 = vmatprep.subr.mxu0 0.0
      %360 = vmatpush2.msra.mxu0 0.0
      %361 = vmatprep.subr.mxu0 0.0
      %362 = vmatpush2.msra.mxu0 0.0
      %363 = vmatprep.subr.mxu0 0.0
      %364 = vmatpush2.msra.mxu0 0.0
      %365 = vmatprep.subr.mxu0 0.0
      %366 = vmatpush2.msra.mxu0 0.0
      %367 = vmatprep.subr.mxu0 0.0
      %368 = vmatpush2.msra.mxu0 0.0
      %369 = vmatprep.subr.mxu0 0.0
      %370 = vmatpush2.msra.mxu0 0.0
      %371 = vmatprep.subr.mxu0 0.0
      %372 = vmatpush2.msra.mxu0 0.0
      %373 = vmatprep.subr.mxu0 0.0
      %374 = vmatpush2.msra.mxu0 0.0
      %375 = vmatprep.subr.mxu0 0.0
      %376 = vmatpush2.msra.mxu0 0.0
      %377 = vmatprep.subr.mxu0 0.0
      %378 = vmatpush2.msra.mxu0 0.0
      %379 = vmatprep.subr.mxu0 0.0
      %380 = vmatpush2.msra.mxu0 0.0
      %381 = vmatprep.mubr.f32.mxu0 0.0
      %382 = vmatmul.mubr.f32.gmra.mxu0 %v315
      %v383 = vpop.f32.mrf.mxu0
      %v384 = vadd.f32 %v313, %v383
      %v385 = vpop.f32.mrf.mxu0
      %386 = vdwg.mxu0
      %vm387 = vcmask 24576
      %388 = vst.msk [vmem:[#allocation5] sm:$0x1] %vm387, %v384
      %v389 = vld [vmem:[#allocation9] sm:$0x1]
      %v390 = vld [vmem:[#allocation2] sm:$0x1]
      %392 = vset.pattern.permute.xlu0 0
      %393 = vperm.xlu0 %392, %v390
      %v394 = vpop.permute.xlu0 %393
      %v396 = vlaneseq
      %v397 = vshrl.u32 %v396, 7
      %v398 = vsub.s32 0, %v397
      %v399 = vrot.slane %v394, %v398
      %v400 = vsub.f32 %v389, %v399
      %v401 = vmul.f32 %v400, 1.442695
      %v402 = vpow.pop %v401
      %v403 = vmul.f32 %v402, %v306
      %404 = vst [vmem:[#allocation9] sm:$0x1] %v403
    $region25: #{tpu_custom_call.1} parent=1 // pred_fallthru
      _
    // Predicated region
    $region26: #{tpu_custom_call.1} parent=1 // pred_check
      _
    $region27: #{tpu_custom_call.1} parent=1 // pred_check_branch
      %406 = sbr.rel (0) target = $region29
    $region28: #{tpu_custom_call.1} parent=1 // pred_region
      %s408 = ssub.s32 16, 16
      %409 = vsyncadd [#allocation6], %s408
      %s411 = sshll.u32 [#allocation5], 4
      %s412 = int_to_ptr.vmem [resolvable:$true] %s411
      %414 = dma.vmem_to_hbm [thread:$0]  %s412, 16, %s4, [#allocation6]
    $region29: #{tpu_custom_call.1} parent=1 // pred_fallthru
      _
    // Predicated region
    $region30: #{tpu_custom_call.1} parent=1 // pred_check
      _
    $region31: #{tpu_custom_call.1} parent=1 // pred_check_branch
      %416 = sbr.rel (0) target = $region33
    $region32: #{tpu_custom_call.1} parent=1 // pred_region
      %s418 = ssub.s32 16, 16
      %419 = vsyncadd [#allocation8], %s418
      %s421 = sshll.u32 [#allocation7], 4
      %s422 = int_to_ptr.vmem [resolvable:$true] %s421
      %424 = dma.vmem_to_hbm [thread:$0]  %s422, 16, %s5, [#allocation8]
    $region33: #{tpu_custom_call.1} parent=1 // pred_fallthru
      _
    // Predicated region
    $region34: #{tpu_custom_call.1} parent=1 // pred_check
      _
    $region35: #{tpu_custom_call.1} parent=1 // pred_check_branch
      %426 = sbr.rel (0) target = $region37
    $region36: #{tpu_custom_call.1} parent=1 // pred_region
      %s428 = ssub.s32 16, 16
      %429 = vsyncadd [#allocation8], %s428
      %s431 = sshll.u32 [#allocation9], 4
      %s432 = int_to_ptr.vmem [resolvable:$true] %s431
      %434 = dma.vmem_to_hbm [thread:$0]  %s432, 16, %s6, [#allocation8]
    $region37: #{tpu_custom_call.1} parent=1 // pred_fallthru
      _
    // Predicated region
    $region38: #{tpu_custom_call.1} parent=1 // pred_check
      _
    $region39: #{tpu_custom_call.1} parent=1 // pred_check_branch
      %436 = sbr.rel (0) target = $region41
    $region40: #{tpu_custom_call.1} parent=1 // pred_region
      %437 = dma.done [#allocation6], 16
    $region41: #{tpu_custom_call.1} parent=1 // pred_fallthru
      _
    // Predicated region
    $region42: #{tpu_custom_call.1} parent=1 // pred_check
      _
    $region43: #{tpu_custom_call.1} parent=1 // pred_check_branch
      %439 = sbr.rel (0) target = $region45
    $region44: #{tpu_custom_call.1} parent=1 // pred_region
      %440 = dma.done [#allocation8], 16
    $region45: #{tpu_custom_call.1} parent=1 // pred_fallthru
      _
    // Predicated region
    $region46: #{tpu_custom_call.1} parent=1 // pred_check
      _
    $region47: #{tpu_custom_call.1} parent=1 // pred_check_branch
      %442 = sbr.rel (0) target = $region49
    $region48: #{tpu_custom_call.1} parent=1 // pred_region
      %443 = dma.done [#allocation8], 16
    $region49: #{tpu_custom_call.1} parent=1 // pred_fallthru
      _
    %444 = vsyncpa [#allocation6], 1
    %445 = vsyncpa [#allocation8], 1

</llo_original>
